<compile_context>
chip_gen: v7x
topology: tpu7x:2x2x1
jax: 0.10.0
libtpu: 0.0.40
codegen_flags: <defaults>
</compile_context>

<pallas_src>
import functools

import jax
import jax.numpy as jnp
from jax import lax
from jax.experimental import pallas as pl
from jax.experimental.pallas import tpu as pltpu


def _round_up(x, m):
    return ((x + m - 1) // m) * m


def _pick_tile(R, M, elem_bytes, block_budget_bytes):
    # One (R, tile) block occupies round_up(R, 8) * tile * elem_bytes in VMEM
    # (sublane padding).  Cap it at block_budget_bytes (~2 MiB): the HBM
    # roofline is already saturated there and it keeps the working set tiny on
    # v7x's 64 MiB VMEM.
    r_pad = max(_round_up(R, 8), 8)
    max_tile = max(128, (block_budget_bytes // (r_pad * elem_bytes)) // 128 * 128)
    return int(min(max_tile, _round_up(M, 128)))


@functools.partial(jax.jit, static_argnames=("block_budget_bytes",))
def tversky_loss(y_true, y_pred, block_budget_bytes=2 << 20):
    """y_true, y_pred: (N, C, D, H, W). Returns shape-(1,) float32 loss."""
    N, C = y_true.shape[0], y_true.shape[1]
    M = 1
    for s in y_true.shape[2:]:
        M *= s
    R = N * C

    # Free reshapes: batch*channel land on sublanes, spatial dims on lanes.
    yt = y_true.reshape(R, M)
    yp = y_pred.reshape(R, M)

    elem_bytes = max(y_true.dtype.itemsize, y_pred.dtype.itemsize)
    tile = _pick_tile(R, M, elem_bytes, block_budget_bytes)
    num_t = -(-M // tile)                       # ceil(M / tile)

    # Split lane tiles into (outer parallel) x (inner reduction) so v7x's two
    # TensorCores both get work even when there is no batch-level parallelism.
    m_outer = min(num_t, 2)
    m_inner = -(-num_t // m_outer)
    overflow = (m_outer * m_inner != num_t)     # uneven split -> dummy tiles
    full_tiles = M // tile                      # tiles needing no column mask
    needs_mask = (M % tile != 0) or overflow

    def in_idx(mo, mi):
        t = mo * m_inner + mi
        if overflow:
            t = jnp.minimum(t, num_t - 1)       # dummy tiles re-read last block
        return (0, t)

    def kernel(yt_ref, yp_ref, num_ref, den_ref):
        # yt_ref / yp_ref: (R, tile) blocks; num_ref / den_ref: (R, 1) resident
        # accumulators (one per M_outer chunk).
        mo = pl.program_id(0)
        mi = pl.program_id(1)

        @pl.when(mi == 0)
        def _():
            num_ref[...] = jnp.zeros_like(num_ref)
            den_ref[...] = jnp.zeros_like(den_ref)

        t = mo * m_inner + mi                   # global (unclamped) tile index

        def load():
            return (yt_ref[...].astype(jnp.float32),
                    yp_ref[...].astype(jnp.float32))

        def accum(g0, p0):
            num_ref[...] += jnp.sum(p0 * g0, axis=-1, keepdims=True)
            den_ref[...] += jnp.sum(p0 + g0, axis=-1, keepdims=True)

        if needs_mask:
            @pl.when(t < full_tiles)
            def _():
                g0, p0 = load()
                accum(g0, p0)

            @pl.when(t >= full_tiles)
            def _():
                g0, p0 = load()
                col = t * tile + lax.broadcasted_iota(jnp.int32, (R, tile), 1)
                valid = col < M
                # Mask BEFORE the multiply / add so garbage tail lanes cannot
                # propagate NaN/Inf.
                accum(jnp.where(valid, g0, 0.0), jnp.where(valid, p0, 0.0))
        else:
            g0, p0 = load()
            accum(g0, p0)

    in_spec = pl.BlockSpec((R, tile), in_idx)
    acc_spec = pl.BlockSpec((None, R, 1), lambda mo, mi: (mo, 0, 0))

    cost = pl.CostEstimate(
        flops=int(3 * R * M),
        transcendentals=0,
        bytes_accessed=int(R * M * (y_true.dtype.itemsize + y_pred.dtype.itemsize)
                           + 2 * m_outer * R * 4),
    )

    num_p, den_p = pl.pallas_call(
        kernel,
        out_shape=(
            jax.ShapeDtypeStruct((m_outer, R, 1), jnp.float32),
            jax.ShapeDtypeStruct((m_outer, R, 1), jnp.float32),
        ),
        grid_spec=pltpu.PrefetchScalarGridSpec(
            num_scalar_prefetch=0,
            grid=(m_outer, m_inner),
            in_specs=[in_spec, in_spec],
            out_specs=(acc_spec, acc_spec),
        ),
        compiler_params=pltpu.CompilerParams(
            dimension_semantics=("parallel", "arbitrary"),
            vmem_limit_bytes=32 << 20,          # fits v5e/v6e/v7x scoped VMEM
        ),
        cost_estimate=cost,
    )(yt, yp)

    # Epilogue: combine per-chunk partials, fold rows back to (N, C), reduce
    # over batch.  den = 0.5 * (sum p0 + sum g0)  ==  num + 0.5*sum(p0*g1)
    # + 0.5*sum(p1*g0) for alpha = beta = 0.5.
    num_c = jnp.sum(num_p[..., 0], axis=0).reshape(N, C).sum(axis=0)
    spg_c = jnp.sum(den_p[..., 0], axis=0).reshape(N, C).sum(axis=0)
    den_c = 0.5 * spg_c
    T = jnp.sum(num_c / den_c)
    return jnp.full((1,), C, dtype=jnp.float32) - T


def tversky_loss_ref(y_true, y_pred):
    """Plain-JAX reference mirroring the PyTorch module exactly."""
    dim = (0, 2, 3, 4)
    p0 = y_pred
    p1 = 1.0 - y_pred
    g0 = y_true
    g1 = 1.0 - y_true
    num = jnp.sum(p0 * g0, axis=dim)
    den = num + 0.5 * jnp.sum(p0 * g1, axis=dim) + 0.5 * jnp.sum(p1 * g0, axis=dim)
    T = jnp.sum(num / den)
    return jnp.full((1,), y_true.shape[1], dtype=jnp.float32) - T


if __name__ == "__main__":
    key = jax.random.PRNGKey(0)
    ks = jax.random.split(key, 6)

    def make_inputs(k1, k2, shape):
        C = shape[1]
        logits_t = jax.random.normal(k1, shape, dtype=jnp.float32)
        y_true = jax.nn.one_hot(jnp.argmax(logits_t, axis=1), C, axis=1,
                                dtype=jnp.float32)
        y_pred = jax.nn.softmax(
            jax.random.normal(k2, shape, dtype=jnp.float32), axis=1)
        return y_true, y_pred

    # 1) Lane-aligned spatial size (M = 512), default tile budget.
    yt1, yp1 = make_inputs(ks[0], ks[1], (2, 4, 8, 8, 8))
    l1 = jax.block_until_ready(tversky_loss(yt1, yp1))
    r1 = tversky_loss_ref(yt1, yp1)
    assert l1.shape == (1,)
    assert jnp.allclose(l1, r1, rtol=1e-5, atol=1e-5), (l1, r1)

    # 2) Ragged spatial size (M = 315): exercises the in-kernel tail mask.
    yt2, yp2 = make_inputs(ks[2], ks[3], (2, 4, 5, 7, 9))
    l2 = jax.block_until_ready(tversky_loss(yt2, yp2))
    r2 = tversky_loss_ref(yt2, yp2)
    assert jnp.allclose(l2, r2, rtol=1e-5, atol=1e-5), (l2, r2)

    # 3) Tiny block budget forces multiple lane tiles: exercises the parallel
    #    M_outer split, overflow-tile clamping+masking, ragged tail, N=1 and a
    #    row count (N*C = 3) that is not a multiple of 8.
    yt3, yp3 = make_inputs(ks[4], ks[5], (1, 3, 5, 7, 9))
    l3 = jax.block_until_ready(tversky_loss(yt3, yp3, block_budget_bytes=4096))
    r3 = tversky_loss_ref(yt3, yp3)
    assert jnp.allclose(l3, r3, rtol=1e-5, atol=1e-5), (l3, r3)

    print("KERNEL_OK")
</pallas_src>

<mosaic_0001>
module attributes {stable_mosaic.version = 11 : i64} {
  func.func @kernel(%arg0: i32, %arg1: i32, %arg2: memref<8x512xf32, #tpu.memory_space<vmem>>, %arg3: memref<8x512xf32, #tpu.memory_space<vmem>>, %arg4: memref<1x8x1xf32, #tpu.memory_space<vmem>>, %arg5: memref<1x8x1xf32, #tpu.memory_space<vmem>>) attributes {dimension_semantics = [#tpu.dimension_semantics<parallel>, #tpu.dimension_semantics<arbitrary>], iteration_bounds = array<i64: 1, 1>, scalar_prefetch = 0 : i64, scratch_operands = 0 : i64, tpu.core_type = #tpu.core_type<tc>, window_params = [{transform_indices = @transform_0, window_bounds = array<i64: 8, 512>}, {transform_indices = @transform_1, window_bounds = array<i64: 8, 512>}, {transform_indices = @transform_2, window_bounds = array<i64: 1, 8, 1>}, {transform_indices = @transform_3, window_bounds = array<i64: 1, 8, 1>}]} {
    %c0_i32 = arith.constant 0 : i32
    %0 = arith.cmpi eq, %arg1, %c0_i32 : i32
    %1 = arith.extui %0 : i1 to i32
    %c0_i32_0 = arith.constant 0 : i32
    %2 = arith.cmpi ne, %1, %c0_i32_0 : i32
    scf.if %2 {
      %cst_17 = arith.constant 0.000000e+00 : f32
      %23 = vector.broadcast %cst_17 : f32 to vector<8x1xf32>
      %c0_18 = arith.constant 0 : index
      %c0_19 = arith.constant 0 : index
      %c0_20 = arith.constant 0 : index
      %24 = vector.load %arg4[%c0_18, %c0_19, %c0_20] : memref<1x8x1xf32, #tpu.memory_space<vmem>>, vector<1x8x1xf32>
      %25 = vector.shape_cast %24 : vector<1x8x1xf32> to vector<8x1xf32>
      %26 = vector.shape_cast %23 : vector<8x1xf32> to vector<1x8x1xf32>
      tpu.vector_store %arg4[%c0_18, %c0_19, %c0_20], %26 {strides = array<i32>} : memref<1x8x1xf32, #tpu.memory_space<vmem>>, vector<1x8x1xf32>,
      %cst_21 = arith.constant 0.000000e+00 : f32
      %27 = vector.broadcast %cst_21 : f32 to vector<8x1xf32>
      %c0_22 = arith.constant 0 : index
      %c0_23 = arith.constant 0 : index
      %c0_24 = arith.constant 0 : index
      %28 = vector.load %arg5[%c0_22, %c0_23, %c0_24] : memref<1x8x1xf32, #tpu.memory_space<vmem>>, vector<1x8x1xf32>
      %29 = vector.shape_cast %28 : vector<1x8x1xf32> to vector<8x1xf32>
      %30 = vector.shape_cast %27 : vector<8x1xf32> to vector<1x8x1xf32>
      tpu.vector_store %arg5[%c0_22, %c0_23, %c0_24], %30 {strides = array<i32>} : memref<1x8x1xf32, #tpu.memory_space<vmem>>, vector<1x8x1xf32>,
    } else {
    }
    %c0 = arith.constant 0 : index
    %c0_1 = arith.constant 0 : index
    %3 = vector.load %arg2[%c0, %c0_1] : memref<8x512xf32, #tpu.memory_space<vmem>>, vector<8x512xf32>
    %c0_2 = arith.constant 0 : index
    %c0_3 = arith.constant 0 : index
    %4 = vector.load %arg3[%c0_2, %c0_3] : memref<8x512xf32, #tpu.memory_space<vmem>>, vector<8x512xf32>
    %c0_4 = arith.constant 0 : index
    %c0_5 = arith.constant 0 : index
    %c0_6 = arith.constant 0 : index
    %5 = vector.load %arg4[%c0_4, %c0_5, %c0_6] : memref<1x8x1xf32, #tpu.memory_space<vmem>>, vector<1x8x1xf32>
    %6 = vector.shape_cast %5 : vector<1x8x1xf32> to vector<8x1xf32>
    %7 = arith.mulf %4, %3 : vector<8x512xf32>
    %cst = arith.constant dense<0.000000e+00> : vector<8xf32>
    %8 = vector.multi_reduction <add>, %7, %cst [1] : vector<8x512xf32> to vector<8xf32>
    %9 = vector.shape_cast %8 : vector<8xf32> to vector<8x1xf32>
    %10 = arith.addf %6, %9 : vector<8x1xf32>
    %c0_7 = arith.constant 0 : index
    %c0_8 = arith.constant 0 : index
    %c0_9 = arith.constant 0 : index
    %11 = vector.load %arg4[%c0_7, %c0_8, %c0_9] : memref<1x8x1xf32, #tpu.memory_space<vmem>>, vector<1x8x1xf32>
    %12 = vector.shape_cast %11 : vector<1x8x1xf32> to vector<8x1xf32>
    %13 = vector.shape_cast %10 : vector<8x1xf32> to vector<1x8x1xf32>
    tpu.vector_store %arg4[%c0_7, %c0_8, %c0_9], %13 {strides = array<i32>} : memref<1x8x1xf32, #tpu.memory_space<vmem>>, vector<1x8x1xf32>,
    %c0_10 = arith.constant 0 : index
    %c0_11 = arith.constant 0 : index
    %c0_12 = arith.constant 0 : index
    %14 = vector.load %arg5[%c0_10, %c0_11, %c0_12] : memref<1x8x1xf32, #tpu.memory_space<vmem>>, vector<1x8x1xf32>
    %15 = vector.shape_cast %14 : vector<1x8x1xf32> to vector<8x1xf32>
    %16 = arith.addf %4, %3 : vector<8x512xf32>
    %cst_13 = arith.constant dense<0.000000e+00> : vector<8xf32>
    %17 = vector.multi_reduction <add>, %16, %cst_13 [1] : vector<8x512xf32> to vector<8xf32>
    %18 = vector.shape_cast %17 : vector<8xf32> to vector<8x1xf32>
    %19 = arith.addf %15, %18 : vector<8x1xf32>
    %c0_14 = arith.constant 0 : index
    %c0_15 = arith.constant 0 : index
    %c0_16 = arith.constant 0 : index
    %20 = vector.load %arg5[%c0_14, %c0_15, %c0_16] : memref<1x8x1xf32, #tpu.memory_space<vmem>>, vector<1x8x1xf32>
    %21 = vector.shape_cast %20 : vector<1x8x1xf32> to vector<8x1xf32>
    %22 = vector.shape_cast %19 : vector<8x1xf32> to vector<1x8x1xf32>
    tpu.vector_store %arg5[%c0_14, %c0_15, %c0_16], %22 {strides = array<i32>} : memref<1x8x1xf32, #tpu.memory_space<vmem>>, vector<1x8x1xf32>,
    return
  }
  func.func @transform_0(%arg0: i32, %arg1: i32) -> (i32, i32) {
    %c1_i32 = arith.constant 1 : i32
    %0 = arith.muli %arg0, %c1_i32 : i32
    %1 = arith.addi %0, %arg1 : i32
    %c0_i32 = arith.constant 0 : i32
    %c0_i32_0 = arith.constant 0 : i32
    return %c0_i32, %1 : i32, i32
  }
  func.func @transform_1(%arg0: i32, %arg1: i32) -> (i32, i32) {
    %c1_i32 = arith.constant 1 : i32
    %0 = arith.muli %arg0, %c1_i32 : i32
    %1 = arith.addi %0, %arg1 : i32
    %c0_i32 = arith.constant 0 : i32
    %c0_i32_0 = arith.constant 0 : i32
    return %c0_i32, %1 : i32, i32
  }
  func.func @transform_2(%arg0: i32, %arg1: i32) -> (i32, i32, i32) {
    %c0_i32 = arith.constant 0 : i32
    %c0_i32_0 = arith.constant 0 : i32
    %c0_i32_1 = arith.constant 0 : i32
    return %arg0, %c0_i32, %c0_i32_0 : i32, i32, i32
  }
  func.func @transform_3(%arg0: i32, %arg1: i32) -> (i32, i32, i32) {
    %c0_i32 = arith.constant 0 : i32
    %c0_i32_0 = arith.constant 0 : i32
    %c0_i32_1 = arith.constant 0 : i32
    return %arg0, %c0_i32, %c0_i32_0 : i32, i32, i32
  }
}

</mosaic_0001>

<llo_original>
// kernel: tversky_loss.1
$region0: #{tversky_loss.1}
  #allocation0 [shape = 'u32[]', space=smem, size = 0x4, offset = 0x4, fixed_abs, tag = 'smem constant byte address 0x4 - core index']
  #allocation1 [shape = 'u32[144,128]{1,0:T(1,128)}', space=vmem, size = 0x12000, scoped, tag = 'internal scratch']
  %s0 = inlined_call_operand.vmem [shape: f32[8,512], index: 0, kind: input, shape index: {}]
  %s1 = inlined_call_operand.vmem [shape: f32[8,512], index: 1, kind: input, shape index: {}]
  %s2 = inlined_call_operand.vmem [shape: f32[1,8,1], index: 2, kind: output, shape index: {0}]
  %s3 = inlined_call_operand.vmem [shape: f32[1,8,1], index: 3, kind: output, shape index: {1}]
  %4 = xla_tuple %s2, %s3
  %s5 = sld [smem:[#allocation0]]
  $region30: #{tversky_loss.1} parent=0
    _
  %s7 = ssub.s32 1, %s5
  %s8 = scalar_select 0, %s7, %s5
  // Predicated region
  $region2: #{tversky_loss.1} parent=0 // pred_check
    _
  $region3: #{tversky_loss.1} parent=0 // pred_check_branch
    %10 = sbr.rel (0) target = $region5
  $region4: #{tversky_loss.1} parent=0 // pred_region
    %s11 = sadd.s32 0, 0
    %s12 = smul.u32 4, %s11
    %p13 = scmp.lt.s32.totalorder %s12, 3
    %s14 = scalar_select %p13, %s12, 3
    %s15 = smul.addr %s14, 8
    %s16 = scalar_lea.vmem %s0, %s15
    %s17 = sadd.s32 0, 0
    %s18 = smul.u32 4, %s17
  $region5: #{tversky_loss.1} parent=0 // pred_fallthru
    _
  // Predicated region
  $region6: #{tversky_loss.1} parent=0 // pred_check
    _
  $region7: #{tversky_loss.1} parent=0 // pred_check_branch
    %20 = sbr.rel (0) target = $region9
  $region8: #{tversky_loss.1} parent=0 // pred_region
    %s21 = sadd.s32 0, 0
    %s22 = smul.u32 4, %s21
    %p23 = scmp.lt.s32.totalorder %s22, 3
    %s24 = scalar_select %p23, %s22, 3
    %s25 = smul.addr %s24, 8
    %s26 = scalar_lea.vmem %s1, %s25
    %s27 = sadd.s32 0, 0
    %s28 = smul.u32 4, %s27
  $region9: #{tversky_loss.1} parent=0 // pred_fallthru
    _
  %s29 = sadd.s32 0, 0
  %s30 = smul.u32 4, %s29
  %p31 = scmp.lt.s32.totalorder %s30, 3
  %s32 = scalar_select %p31, %s30, 3
  %s33 = smul.addr %s32, 8
  %s34 = scalar_lea.vmem %s0, %s33
  %s35 = sadd.s32 0, 0
  %s36 = smul.u32 4, %s35
  %p37 = scmp.lt.s32.totalorder %s36, 3
  %s38 = scalar_select %p37, %s36, 3
  %s39 = smul.addr %s38, 8
  %s40 = scalar_lea.vmem %s1, %s39
  %s41 = sadd.s32 0, 0
  %s42 = smul.u32 4, %s41
  %p43 = scmp.lt.s32.totalorder %s42, 3
  %s44 = scalar_select %p43, %s42, 3
  %s45 = smul.addr %s44, 8
  %s46 = scalar_lea.vmem %s0, %s45
  %s47 = sadd.s32 0, 0
  %s48 = smul.u32 4, %s47
  %s49 = sadd.s32 0, 0
  %s50 = smul.u32 4, %s49
  %p51 = scmp.lt.s32.totalorder %s50, 3
  %s52 = scalar_select %p51, %s50, 3
  %s53 = smul.addr %s52, 8
  %s54 = scalar_lea.vmem %s1, %s53
  %s55 = sadd.s32 0, 0
  %s56 = smul.u32 4, %s55
  %p57 = scmp.eq.s32.totalorder 0, 0
  // Predicated region
  $region10: #{tversky_loss.1} parent=0 // pred_check
    %p58 = pneg %p57
  $region11: #{tversky_loss.1} parent=0 // pred_check_branch
    %60 = sbr.rel (%p58) target = $region13
  $region12: #{tversky_loss.1} parent=0 // pred_region
    %vm61 = vcmask 7168
    %62 = vst.msk [vmem:[%s2] sm:$0xff] %vm61, 0.0
    %63 = vst.msk [vmem:[%s3] sm:$0xff] %vm61, 0.0
  $region13: #{tversky_loss.1} parent=0 // pred_fallthru
    _
  %v64 = vld [vmem:[%s46] sm:$0xff]
  %v65 = vld [vmem:[%s46 + $0x8] sm:$0xff]
  %v66 = vld [vmem:[%s46 + $0x10] sm:$0xff]
  %v67 = vld [vmem:[%s46 + $0x18] sm:$0xff]
  %v68 = vld [vmem:[%s54] sm:$0xff]
  %v69 = vld [vmem:[%s54 + $0x8] sm:$0xff]
  %v70 = vld [vmem:[%s54 + $0x10] sm:$0xff]
  %v71 = vld [vmem:[%s54 + $0x18] sm:$0xff]
  %v72 = vld [vmem:[%s2] sm:$0xff]
  %v73 = vmul.f32 %v68, %v64
  %v74 = vmul.f32 %v69, %v65
  %v75 = vmul.f32 %v70, %v66
  %v76 = vmul.f32 %v71, %v67
  %v77 = vadd.f32 %v73, %v74
  %v78 = vadd.f32 %v77, %v75
  %v79 = vadd.f32 %v78, %v76
  %80 = vadd.xlane.f32.xlu0 %v79
  %v81 = vpop.xlane.xlu0 %80
  %v82 = vadd.f32 %v72, %v81
  %vm83 = vcmask 7168
  %84 = vst.msk [vmem:[%s2] sm:$0xff] %vm83, %v82
  %v85 = vld [vmem:[%s3] sm:$0xff]
  %v86 = vadd.f32 %v68, %v64
  %v87 = vadd.f32 %v69, %v65
  %v88 = vadd.f32 %v70, %v66
  %v89 = vadd.f32 %v71, %v67
  %v90 = vadd.f32 %v86, %v87
  %v91 = vadd.f32 %v90, %v88
  %v92 = vadd.f32 %v91, %v89
  %93 = vadd.xlane.f32.xlu0 %v92
  %v94 = vpop.xlane.xlu0 %93
  %v95 = vadd.f32 %v85, %v94
  %96 = vst.msk [vmem:[%s3] sm:$0xff] %vm83, %v95
  // Predicated region
  $region14: #{tversky_loss.1} parent=0 // pred_check
    _
  $region15: #{tversky_loss.1} parent=0 // pred_check_branch
    %98 = sbr.rel (0) target = $region17
  $region16: #{tversky_loss.1} parent=0 // pred_region
    _
  $region17: #{tversky_loss.1} parent=0 // pred_fallthru
    _
  // Predicated region
  $region18: #{tversky_loss.1} parent=0 // pred_check
    _
  $region19: #{tversky_loss.1} parent=0 // pred_check_branch
    %100 = sbr.rel (0) target = $region21
  $region20: #{tversky_loss.1} parent=0 // pred_region
    _
  $region21: #{tversky_loss.1} parent=0 // pred_fallthru
    _
  // Predicated region
  $region22: #{tversky_loss.1} parent=0 // pred_check
    _
  $region23: #{tversky_loss.1} parent=0 // pred_check_branch
    %102 = sbr.rel (0) target = $region25
  $region24: #{tversky_loss.1} parent=0 // pred_region
    _
  $region25: #{tversky_loss.1} parent=0 // pred_fallthru
    _
  // Predicated region
  $region26: #{tversky_loss.1} parent=0 // pred_check
    _
  $region27: #{tversky_loss.1} parent=0 // pred_check_branch
    %104 = sbr.rel (0) target = $region29
  $region28: #{tversky_loss.1} parent=0 // pred_region
    _
  $region29: #{tversky_loss.1} parent=0 // pred_fallthru
    _

</llo_original>
